<compile_context>
chip_gen: v5e
topology: v5e:2x2
jax: 0.10.0
libtpu: 0.0.40
codegen_flags: <defaults>
</compile_context>

<pallas_src>
import functools
import math

import jax
import jax.numpy as jnp
from jax.experimental import pallas as pl
from jax.experimental.pallas import tpu as pltpu


def _sepconv_kernel(x_ref, wf_ref, bf_ref, o_ref, stk_ref, *,
                    Nb, H, Wp, Cin, Cout, Kpad):
    """Nb zero-padded images per grid step, NCHW with flattened spatial dims.

    x_ref  : (Nb, Cin, (H+4)*Wp)  zero-padded images, rows flattened
    wf_ref : (Cout, Kpad)         folded per-tap weights (tap-major K, 0-padded)
    bf_ref : (Cout, 1)            fused bias (pw @ b1 + b2), f32
    o_ref  : (Nb, Cout, H*Wp)     flat output slab (halo columns included)
    stk_ref: (Kpad, H*Wp)         VMEM scratch: stacked tap-shifted activations
    """
    L = H * Wp
    K = 9 * Cin

    # Zero the K-padding rows once per step so the zero weight columns never
    # multiply uninitialized VMEM (cheap; safe under megacore sharding).
    if Kpad > K:
        stk_ref[K:Kpad, :] = jnp.zeros((Kpad - K, L), dtype=stk_ref.dtype)

    w = wf_ref[...]        # (Cout, Kpad)   hoisted out of the image loop
    bias = bf_ref[...]     # (Cout, 1) f32  broadcasts along lanes

    for img in range(Nb):  # static unroll; Nb is kept small by construction
        # Tap (kh, kw) of output flat position j reads padded flat index
        # j + (kh+1)*Wp + (kw-1): every tap is a contiguous lane-offset slice
        # of the flat padded image.  Stack the 9 shifted views along K.
        for kh in range(3):
            for kw in range(3):
                t = 3 * kh + kw
                start = (kh + 1) * Wp + (kw - 1)        # static offsets
                stk_ref[t * Cin:(t + 1) * Cin, :] = x_ref[img, :, start:start + L]
        # One fused MXU matmul: (Cout, 9*Cin) @ (9*Cin, L), f32 accumulation.
        acc = jnp.dot(w, stk_ref[...], preferred_element_type=jnp.float32)
        o_ref[img] = (acc + bias).astype(o_ref.dtype)   # lane-dense store


def _pick_row_stride(H, W):
    """Smallest padded row width Wp >= W+2 with H*Wp % 128 == 0, if cheap."""
    base = W + 2
    step = 128 // math.gcd(H, 128)
    cand = -(-base // step) * step
    if cand - base <= max(8, base // 2):   # accept only modest extra zeros
        return cand
    return base                            # fall back to masked tail stores


def _pick_images_per_step(N, in_bytes_per_img, out_bytes_per_img):
    """Images per grid step: VMEM-budgeted, but keep >=2 steps (v7x 2 TCs)."""
    budget = 8 * 1024 * 1024                       # conservative for v7x VMEM
    per_img = 2 * (in_bytes_per_img + out_bytes_per_img)   # double-buffered
    nb = max(1, budget // per_img)
    nb = min(nb, max(1, N // 2), N)
    while N % nb:
        nb -= 1
    return int(nb)


def sepconv_pallas(x_nchw, dw_w, dw_b, pw_w, pw_b, *, compute_dtype=None):
    """x_nchw: (N,Cin,H,W); dw_w: (Cin,1,3,3); dw_b: (Cin,);
    pw_w: (Cout,Cin,1,1); pw_b: (Cout,).  Returns (N, Cout, H, W)."""
    N, Cin, H, W = x_nchw.shape
    Cout = pw_w.shape[0]
    out_dtype = x_nchw.dtype
    cdt = jnp.dtype(compute_dtype) if compute_dtype is not None else jnp.dtype(out_dtype)

    Wp = _pick_row_stride(H, W)
    L = H * Wp
    Lin = (H + 4) * Wp
    K = 9 * Cin
    Kpad = -(-K // 8) * 8

    # Spatial zero-pad in native NCHW order (no layout transposes): 1 column
    # left + (Wp-W-1) right, 2 rows top/bottom (1 for the conv + 1 extra so
    # every tap-shifted flat slice stays in bounds).
    x_pad = jnp.pad(x_nchw, ((0, 0), (0, 0), (2, 2), (1, Wp - W - 1)))
    x_flat = x_pad.reshape(N, Cin, Lin).astype(cdt)

    # Fold the depthwise 3x3 into the pointwise 1x1 (tiny, done once):
    #   wf[co, t*Cin+ci] = pw[co,ci] * dw[ci,kh,kw],  t = 3*kh + kw
    #   bf[co]           = sum_ci pw[co,ci]*b1[ci] + b2[co]     (exact, f32)
    dwk = jnp.transpose(dw_w[:, 0, :, :], (1, 2, 0)).reshape(9, Cin)   # [t, ci]
    pw = pw_w[:, :, 0, 0]                                              # (Cout, Cin)
    wf = (pw[:, None, :] * dwk[None, :, :]).reshape(Cout, K)
    if Kpad > K:
        wf = jnp.pad(wf, ((0, 0), (0, Kpad - K)))
    wf = wf.astype(cdt)
    bf = (pw.astype(jnp.float32) @ dw_b.astype(jnp.float32)
          + pw_b.astype(jnp.float32)).reshape(Cout, 1)

    itemsize = cdt.itemsize
    out_itemsize = jnp.dtype(out_dtype).itemsize
    Nb = _pick_images_per_step(N, Cin * Lin * itemsize, Cout * L * out_itemsize)

    kernel = functools.partial(_sepconv_kernel, Nb=Nb, H=H, Wp=Wp,
                               Cin=Cin, Cout=Cout, Kpad=Kpad)

    cost = pl.CostEstimate(
        flops=2 * N * Cout * K * L,
        transcendentals=0,
        bytes_accessed=(N * Cin * Lin + Cout * Kpad) * itemsize
                       + N * Cout * L * out_itemsize + Cout * 4,
    )

    out_flat = pl.pallas_call(
        kernel,
        out_shape=jax.ShapeDtypeStruct((N, Cout, L), out_dtype),
        grid_spec=pltpu.PrefetchScalarGridSpec(
            num_scalar_prefetch=0,
            grid=(N // Nb,),
            in_specs=[
                pl.BlockSpec((Nb, Cin, Lin), lambda n: (n, 0, 0)),
                pl.BlockSpec((Cout, Kpad), lambda n: (0, 0)),
                pl.BlockSpec((Cout, 1), lambda n: (0, 0)),
            ],
            out_specs=pl.BlockSpec((Nb, Cout, L), lambda n: (n, 0, 0)),
            scratch_shapes=[pltpu.VMEM((Kpad, L), cdt)],
        ),
        compiler_params=pltpu.CompilerParams(
            dimension_semantics=("parallel",)),
        cost_estimate=cost,
    )(x_flat, wf, bf)

    # Flat position j = y*Wp + (x+1); drop the halo columns.  The reshape is
    # free, the slice is a small strided copy (no transpose).
    return out_flat.reshape(N, Cout, H, Wp)[:, :, :, 1:W + 1]


def sepconv_reference(x_nchw, dw_w, dw_b, pw_w, pw_b):
    """Pure-JAX reference using lax conv (matches PyTorch semantics)."""
    Cin = x_nchw.shape[1]
    out1 = jax.lax.conv_general_dilated(
        x_nchw, dw_w, window_strides=(1, 1), padding=((1, 1), (1, 1)),
        dimension_numbers=("NCHW", "OIHW", "NCHW"),
        feature_group_count=Cin)
    out1 = out1 + dw_b.reshape(1, Cin, 1, 1)
    out = jax.lax.conv_general_dilated(
        out1, pw_w, window_strides=(1, 1), padding="VALID",
        dimension_numbers=("NCHW", "OIHW", "NCHW"))
    out = out + pw_b.reshape(1, pw_w.shape[0], 1, 1)
    return out


if __name__ == "__main__":
    N, Cin, H, W = 2, 4, 16, 16
    Cout = 8

    key = jax.random.PRNGKey(0)
    k_x, k_dw, k_db, k_pw, k_pb = jax.random.split(key, 5)

    x = jax.random.normal(k_x, (N, Cin, H, W), dtype=jnp.float32)
    # Parameter shapes match nn.Conv2d in the module.
    dw_w = 0.1 * jax.random.normal(k_dw, (Cin, 1, 3, 3), dtype=jnp.float32)     # depthwise
    dw_b = 0.1 * jax.random.normal(k_db, (Cin,), dtype=jnp.float32)
    pw_w = 0.1 * jax.random.normal(k_pw, (Cout, Cin, 1, 1), dtype=jnp.float32)  # pointwise
    pw_b = 0.1 * jax.random.normal(k_pb, (Cout,), dtype=jnp.float32)

    ref = jax.block_until_ready(sepconv_reference(x, dw_w, dw_b, pw_w, pw_b))

    # f32 path: matches the module semantics tightly.
    out = jax.block_until_ready(sepconv_pallas(x, dw_w, dw_b, pw_w, pw_b))
    assert out.shape == (N, Cout, H, W)
    assert jnp.allclose(out, ref, atol=1e-5, rtol=1e-5), "f32 mismatch vs reference"

    # bf16-operand path (f32 accumulate): native MXU rate; looser tolerance.
    out_bf = jax.block_until_ready(
        sepconv_pallas(x, dw_w, dw_b, pw_w, pw_b, compute_dtype=jnp.bfloat16))
    assert out_bf.shape == (N, Cout, H, W)
    assert jnp.allclose(out_bf, ref, atol=5e-2, rtol=5e-2), "bf16 mismatch vs reference"

    print("KERNEL_OK")
</pallas_src>

<mosaic_0001>
module attributes {stable_mosaic.version = 11 : i64} {
  func.func @_sepconv_kernel(%arg0: i32, %arg1: memref<1x4x480xf32, #tpu.memory_space<vmem>>, %arg2: memref<8x40xf32, #tpu.memory_space<vmem>>, %arg3: memref<8x1xf32, #tpu.memory_space<vmem>>, %arg4: memref<1x8x384xf32, #tpu.memory_space<vmem>>, %arg5: memref<40x384xf32, #tpu.memory_space<vmem>>) attributes {dimension_semantics = [#tpu.dimension_semantics<parallel>], iteration_bounds = array<i64: 2>, scalar_prefetch = 0 : i64, scratch_operands = 1 : i64, tpu.core_type = #tpu.core_type<tc>, window_params = [{transform_indices = @transform_0, window_bounds = array<i64: 1, 4, 480>}, {pipeline_mode = #tpu.pipeline_mode<synchronous>, transform_indices = @transform_1, window_bounds = array<i64: 8, 40>}, {pipeline_mode = #tpu.pipeline_mode<synchronous>, transform_indices = @transform_2, window_bounds = array<i64: 8, 1>}, {transform_indices = @transform_3, window_bounds = array<i64: 1, 8, 384>}]} {
    %cst = arith.constant 0.000000e+00 : f32
    %0 = vector.broadcast %cst : f32 to vector<4x384xf32>
    %c36 = arith.constant 36 : index
    %c0 = arith.constant 0 : index
    %1 = vector.load %arg5[%c36, %c0] : memref<40x384xf32, #tpu.memory_space<vmem>>, vector<4x384xf32>
    tpu.vector_store %arg5[%c36, %c0], %0 {strides = array<i32>} : memref<40x384xf32, #tpu.memory_space<vmem>>, vector<4x384xf32>,
    %c0_0 = arith.constant 0 : index
    %c0_1 = arith.constant 0 : index
    %2 = vector.load %arg2[%c0_0, %c0_1] : memref<8x40xf32, #tpu.memory_space<vmem>>, vector<8x40xf32>
    %c0_2 = arith.constant 0 : index
    %c0_3 = arith.constant 0 : index
    %3 = vector.load %arg3[%c0_2, %c0_3] : memref<8x1xf32, #tpu.memory_space<vmem>>, vector<8x1xf32>
    %c0_4 = arith.constant 0 : index
    %c0_5 = arith.constant 0 : index
    %c23 = arith.constant 23 : index
    %4 = vector.load %arg1[%c0_4, %c0_5, %c23] : memref<1x4x480xf32, #tpu.memory_space<vmem>>, vector<1x4x384xf32>
    %5 = vector.shape_cast %4 : vector<1x4x384xf32> to vector<4x384xf32>
    %c0_6 = arith.constant 0 : index
    %c0_7 = arith.constant 0 : index
    %6 = vector.load %arg5[%c0_6, %c0_7] : memref<40x384xf32, #tpu.memory_space<vmem>>, vector<4x384xf32>
    tpu.vector_store %arg5[%c0_6, %c0_7], %5 {strides = array<i32>} : memref<40x384xf32, #tpu.memory_space<vmem>>, vector<4x384xf32>,
    %c0_8 = arith.constant 0 : index
    %c0_9 = arith.constant 0 : index
    %c24 = arith.constant 24 : index
    %7 = vector.load %arg1[%c0_8, %c0_9, %c24] : memref<1x4x480xf32, #tpu.memory_space<vmem>>, vector<1x4x384xf32>
    %8 = vector.shape_cast %7 : vector<1x4x384xf32> to vector<4x384xf32>
    %c4 = arith.constant 4 : index
    %c0_10 = arith.constant 0 : index
    %9 = vector.load %arg5[%c4, %c0_10] : memref<40x384xf32, #tpu.memory_space<vmem>>, vector<4x384xf32>
    tpu.vector_store %arg5[%c4, %c0_10], %8 {strides = array<i32>} : memref<40x384xf32, #tpu.memory_space<vmem>>, vector<4x384xf32>,
    %c0_11 = arith.constant 0 : index
    %c0_12 = arith.constant 0 : index
    %c25 = arith.constant 25 : index
    %10 = vector.load %arg1[%c0_11, %c0_12, %c25] : memref<1x4x480xf32, #tpu.memory_space<vmem>>, vector<1x4x384xf32>
    %11 = vector.shape_cast %10 : vector<1x4x384xf32> to vector<4x384xf32>
    %c8 = arith.constant 8 : index
    %c0_13 = arith.constant 0 : index
    %12 = vector.load %arg5[%c8, %c0_13] : memref<40x384xf32, #tpu.memory_space<vmem>>, vector<4x384xf32>
    tpu.vector_store %arg5[%c8, %c0_13], %11 {strides = array<i32>} : memref<40x384xf32, #tpu.memory_space<vmem>>, vector<4x384xf32>,
    %c0_14 = arith.constant 0 : index
    %c0_15 = arith.constant 0 : index
    %c47 = arith.constant 47 : index
    %13 = vector.load %arg1[%c0_14, %c0_15, %c47] : memref<1x4x480xf32, #tpu.memory_space<vmem>>, vector<1x4x384xf32>
    %14 = vector.shape_cast %13 : vector<1x4x384xf32> to vector<4x384xf32>
    %c12 = arith.constant 12 : index
    %c0_16 = arith.constant 0 : index
    %15 = vector.load %arg5[%c12, %c0_16] : memref<40x384xf32, #tpu.memory_space<vmem>>, vector<4x384xf32>
    tpu.vector_store %arg5[%c12, %c0_16], %14 {strides = array<i32>} : memref<40x384xf32, #tpu.memory_space<vmem>>, vector<4x384xf32>,
    %c0_17 = arith.constant 0 : index
    %c0_18 = arith.constant 0 : index
    %c48 = arith.constant 48 : index
    %16 = vector.load %arg1[%c0_17, %c0_18, %c48] : memref<1x4x480xf32, #tpu.memory_space<vmem>>, vector<1x4x384xf32>
    %17 = vector.shape_cast %16 : vector<1x4x384xf32> to vector<4x384xf32>
    %c16 = arith.constant 16 : index
    %c0_19 = arith.constant 0 : index
    %18 = vector.load %arg5[%c16, %c0_19] : memref<40x384xf32, #tpu.memory_space<vmem>>, vector<4x384xf32>
    tpu.vector_store %arg5[%c16, %c0_19], %17 {strides = array<i32>} : memref<40x384xf32, #tpu.memory_space<vmem>>, vector<4x384xf32>,
    %c0_20 = arith.constant 0 : index
    %c0_21 = arith.constant 0 : index
    %c49 = arith.constant 49 : index
    %19 = vector.load %arg1[%c0_20, %c0_21, %c49] : memref<1x4x480xf32, #tpu.memory_space<vmem>>, vector<1x4x384xf32>
    %20 = vector.shape_cast %19 : vector<1x4x384xf32> to vector<4x384xf32>
    %c20 = arith.constant 20 : index
    %c0_22 = arith.constant 0 : index
    %21 = vector.load %arg5[%c20, %c0_22] : memref<40x384xf32, #tpu.memory_space<vmem>>, vector<4x384xf32>
    tpu.vector_store %arg5[%c20, %c0_22], %20 {strides = array<i32>} : memref<40x384xf32, #tpu.memory_space<vmem>>, vector<4x384xf32>,
    %c0_23 = arith.constant 0 : index
    %c0_24 = arith.constant 0 : index
    %c71 = arith.constant 71 : index
    %22 = vector.load %arg1[%c0_23, %c0_24, %c71] : memref<1x4x480xf32, #tpu.memory_space<vmem>>, vector<1x4x384xf32>
    %23 = vector.shape_cast %22 : vector<1x4x384xf32> to vector<4x384xf32>
    %c24_25 = arith.constant 24 : index
    %c0_26 = arith.constant 0 : index
    %24 = vector.load %arg5[%c24_25, %c0_26] : memref<40x384xf32, #tpu.memory_space<vmem>>, vector<4x384xf32>
    tpu.vector_store %arg5[%c24_25, %c0_26], %23 {strides = array<i32>} : memref<40x384xf32, #tpu.memory_space<vmem>>, vector<4x384xf32>,
    %c0_27 = arith.constant 0 : index
    %c0_28 = arith.constant 0 : index
    %c72 = arith.constant 72 : index
    %25 = vector.load %arg1[%c0_27, %c0_28, %c72] : memref<1x4x480xf32, #tpu.memory_space<vmem>>, vector<1x4x384xf32>
    %26 = vector.shape_cast %25 : vector<1x4x384xf32> to vector<4x384xf32>
    %c28 = arith.constant 28 : index
    %c0_29 = arith.constant 0 : index
    %27 = vector.load %arg5[%c28, %c0_29] : memref<40x384xf32, #tpu.memory_space<vmem>>, vector<4x384xf32>
    tpu.vector_store %arg5[%c28, %c0_29], %26 {strides = array<i32>} : memref<40x384xf32, #tpu.memory_space<vmem>>, vector<4x384xf32>,
    %c0_30 = arith.constant 0 : index
    %c0_31 = arith.constant 0 : index
    %c73 = arith.constant 73 : index
    %28 = vector.load %arg1[%c0_30, %c0_31, %c73] : memref<1x4x480xf32, #tpu.memory_space<vmem>>, vector<1x4x384xf32>
    %29 = vector.shape_cast %28 : vector<1x4x384xf32> to vector<4x384xf32>
    %c32 = arith.constant 32 : index
    %c0_32 = arith.constant 0 : index
    %30 = vector.load %arg5[%c32, %c0_32] : memref<40x384xf32, #tpu.memory_space<vmem>>, vector<4x384xf32>
    tpu.vector_store %arg5[%c32, %c0_32], %29 {strides = array<i32>} : memref<40x384xf32, #tpu.memory_space<vmem>>, vector<4x384xf32>,
    %c0_33 = arith.constant 0 : index
    %c0_34 = arith.constant 0 : index
    %31 = vector.load %arg5[%c0_33, %c0_34] : memref<40x384xf32, #tpu.memory_space<vmem>>, vector<40x384xf32>
    %cst_35 = arith.constant dense<0.000000e+00> : vector<8x384xf32>
    %32 = tpu.matmul %2, %31, %cst_35 {dimension_numbers = #tpu.dot_dimension_numbers<[1], [0], [0], [1], [0, 0, 1, 1], [], []>} : vector<8x40xf32>, vector<40x384xf32>, vector<8x384xf32> -> vector<8x384xf32>
    %33 = vector.broadcast %3 : vector<8x1xf32> to vector<8x384xf32>
    %34 = arith.addf %32, %33 : vector<8x384xf32>
    %c0_36 = arith.constant 0 : index
    %c0_37 = arith.constant 0 : index
    %c0_38 = arith.constant 0 : index
    %35 = vector.load %arg4[%c0_36, %c0_37, %c0_38] : memref<1x8x384xf32, #tpu.memory_space<vmem>>, vector<1x8x384xf32>
    %36 = vector.shape_cast %35 : vector<1x8x384xf32> to vector<8x384xf32>
    %37 = vector.shape_cast %34 : vector<8x384xf32> to vector<1x8x384xf32>
    tpu.vector_store %arg4[%c0_36, %c0_37, %c0_38], %37 {strides = array<i32>} : memref<1x8x384xf32, #tpu.memory_space<vmem>>, vector<1x8x384xf32>,
    return
  }
  func.func @transform_0(%arg0: i32) -> (i32, i32, i32) {
    %c0_i32 = arith.constant 0 : i32
    %c0_i32_0 = arith.constant 0 : i32
    %c0_i32_1 = arith.constant 0 : i32
    return %arg0, %c0_i32, %c0_i32_0 : i32, i32, i32
  }
  func.func @transform_1(%arg0: i32) -> (i32, i32) {
    %c0_i32 = arith.constant 0 : i32
    %c0_i32_0 = arith.constant 0 : i32
    %c0_i32_1 = arith.constant 0 : i32
    return %c0_i32, %c0_i32_0 : i32, i32
  }
  func.func @transform_2(%arg0: i32) -> (i32, i32) {
    %c0_i32 = arith.constant 0 : i32
    %c0_i32_0 = arith.constant 0 : i32
    %c0_i32_1 = arith.constant 0 : i32
    return %c0_i32, %c0_i32_0 : i32, i32
  }
  func.func @transform_3(%arg0: i32) -> (i32, i32, i32) {
    %c0_i32 = arith.constant 0 : i32
    %c0_i32_0 = arith.constant 0 : i32
    %c0_i32_1 = arith.constant 0 : i32
    return %arg0, %c0_i32, %c0_i32_0 : i32, i32, i32
  }
}

</mosaic_0001>

<llo_original>
// kernel: tpu_custom_call.1
$region0: #{tpu_custom_call.1}
  #allocation0 [shape = 'u32[]', space=smem, size = 0x4, offset = 0x4, fixed_abs, tag = 'smem constant byte address 0x4 - core index']
  #allocation1 [shape = 'u32[72,128]{1,0:T(1,128)}', space=vmem, size = 0x9000, scoped, tag = 'internal scratch']
  #allocation2 [shape = 'f32[40,384]{1,0:T(8,128)}', space=vmem, size = 0xf000, scoped, tag = 'scratch operand']
  %s0 = inlined_call_operand.hbm [shape: f32[2,4,480], index: 0, kind: input, shape index: {}]
  %s1 = inlined_call_operand.vmem [shape: f32[8,40], index: 1, kind: input, shape index: {}]
  %s2 = inlined_call_operand.vmem [shape: f32[8,1], index: 2, kind: input, shape index: {}]
  %s3 = inlined_call_operand.hbm [shape: f32[2,8,384], index: 3, kind: output, shape index: {}]
  %s4 = sld [smem:[#allocation0]]
  $region49: #{tpu_custom_call.1} parent=0
    _
  %s6 = ssub.s32 1, %s4
  %s7 = scalar_select 0, %s6, %s4
  $region1: #{tpu_custom_call.1} parent=0
    #allocation3 [shape = 'u8[16384]{0}', space=vmem, size = 0x4000, scoped, tag = 'input window, operand 0']
    #allocation4 [shape = 's32[2]{0}', space=sflag, size = 0x8, scoped, tag = 'scoped memory for tpu_custom_call.1']
    #allocation5 [shape = 's32[2]{0}', space=sflag, size = 0x8, scoped, tag = 'scoped memory for tpu_custom_call.1']
    #allocation6 [shape = 'u8[24576]{0}', space=vmem, size = 0x6000, scoped, tag = 'output window, operand 0']
    %8 = vsyncpa [#allocation4], 0
    %s9 = scalar_lea.sflag [#allocation4], 1
    %10 = vsyncpa %s9, 0
    %11 = vsyncpa [#allocation5], 0
    %s12 = scalar_lea.sflag [#allocation5], 1
    %13 = vsyncpa %s12, 0
    loop: start=0, step=1, limit=4
    $region2: #{tpu_custom_call.1} parent=1 // loop_pre_header
      _
    $region3: #{tpu_custom_call.1} parent=1 // loop_header
      %s15 = sphi 0, %s19
      %p16 = scmp.ge.s32.totalorder %s15, 4
      %s25 = sphi 0, %s27
      %s28 = sphi 0, %s25
      %s29 = sphi 0, %s28
      %s45 = sphi 0, %s29
      %s49 = sphi 0, %s49
      %s51 = sphi 0, %s49
      %s52 = sphi 0, %s51
      %s66 = sphi 0, %s52
      %s70 = sphi 0, %s70
      %s72 = sphi 0, %s70
      %s73 = sphi 0, %s72
      %s87 = sphi 0, %s73
      %s93 = sphi 0, %s95
      %s96 = sphi 0, %s93
      %s97 = sphi 0, %s96
      %s113 = sphi 0, %s97
    $region4: #{tpu_custom_call.1} parent=1 // loop_header_branch
      %18 = sbr.rel (%p16) target = $region8
    $region5: #{tpu_custom_call.1} parent=1 // loop_body
      %s20 = ssub.s32 %s15, 1
      %s21 = ssub.s32 %s15, 2
      %s22 = sadd.s32 %s15, 1
      %s23 = ssub.s32 %s15, %s22
      %p24 = scmp.eq.s32.totalorder %s23, 0
      %s26 = sadd.s32 %s25, 1
      %s27 = scalar_select %p24, %s25, %s26
      %p30 = pneg %p24
      %p31 = scmp.eq.s32.totalorder %s15, 1
      %p32 = por %p30, %p31
      %p33 = scmp.ne.s32.totalorder %s25, %s28
      %p34 = scmp.eq.s32.totalorder %s15, 0
      %p35 = por %p33, %p34
      %p36 = scmp.ne.s32.totalorder %s25, %s28
      %p37 = scmp.eq.s32.totalorder %s20, 1
      %p38 = por %p36, %p37
      %p39 = scmp.ne.s32.totalorder %s28, %s29
      %p40 = scmp.eq.s32.totalorder %s20, 0
      %p41 = por %p39, %p40
      %p42 = scmp.ne.s32.totalorder %s28, %s29
      %p43 = scmp.eq.s32.totalorder %s21, 1
      %p44 = por %p42, %p43
      %p46 = scmp.ne.s32.totalorder %s29, %s45
      %p47 = scmp.eq.s32.totalorder %s21, 0
      %p48 = por %p46, %p47
      %s50 = sadd.s32 %s49, 1
      %p53 = scmp.eq.s32.totalorder %s15, 1
      %p54 = scmp.ne.s32.totalorder %s49, %s51
      %p55 = scmp.eq.s32.totalorder %s15, 0
      %p56 = por %p54, %p55
      %p57 = scmp.ne.s32.totalorder %s49, %s51
      %p58 = scmp.eq.s32.totalorder %s20, 1
      %p59 = por %p57, %p58
      %p60 = scmp.ne.s32.totalorder %s51, %s52
      %p61 = scmp.eq.s32.totalorder %s20, 0
      %p62 = por %p60, %p61
      %p63 = scmp.ne.s32.totalorder %s51, %s52
      %p64 = scmp.eq.s32.totalorder %s21, 1
      %p65 = por %p63, %p64
      %p67 = scmp.ne.s32.totalorder %s52, %s66
      %p68 = scmp.eq.s32.totalorder %s21, 0
      %p69 = por %p67, %p68
      %s71 = sadd.s32 %s70, 1
      %p74 = scmp.eq.s32.totalorder %s15, 1
      %p75 = scmp.ne.s32.totalorder %s70, %s72
      %p76 = scmp.eq.s32.totalorder %s15, 0
      %p77 = por %p75, %p76
      %p78 = scmp.ne.s32.totalorder %s70, %s72
      %p79 = scmp.eq.s32.totalorder %s20, 1
      %p80 = por %p78, %p79
      %p81 = scmp.ne.s32.totalorder %s72, %s73
      %p82 = scmp.eq.s32.totalorder %s20, 0
      %p83 = por %p81, %p82
      %p84 = scmp.ne.s32.totalorder %s72, %s73
      %p85 = scmp.eq.s32.totalorder %s21, 1
      %p86 = por %p84, %p85
      %p88 = scmp.ne.s32.totalorder %s73, %s87
      %p89 = scmp.eq.s32.totalorder %s21, 0
      %p90 = por %p88, %p89
      %s91 = ssub.s32 %s15, %s22
      %p92 = scmp.eq.s32.totalorder %s91, 0
      %s94 = sadd.s32 %s93, 1
      %s95 = scalar_select %p92, %s93, %s94
      %p98 = pneg %p92
      %p99 = scmp.eq.s32.totalorder %s15, 1
      %p100 = por %p98, %p99
      %p101 = scmp.ne.s32.totalorder %s93, %s96
      %p102 = scmp.eq.s32.totalorder %s15, 0
      %p103 = por %p101, %p102
      %p104 = scmp.ne.s32.totalorder %s93, %s96
      %p105 = scmp.eq.s32.totalorder %s20, 1
      %p106 = por %p104, %p105
      %p107 = scmp.ne.s32.totalorder %s96, %s97
      %p108 = scmp.eq.s32.totalorder %s20, 0
      %p109 = por %p107, %p108
      %p110 = scmp.ne.s32.totalorder %s96, %s97
      %p111 = scmp.eq.s32.totalorder %s21, 1
      %p112 = por %p110, %p111
      %p114 = scmp.ne.s32.totalorder %s97, %s113
      %p115 = scmp.eq.s32.totalorder %s21, 0
      %p116 = por %p114, %p115
      %p117 = scmp.le.s32.totalorder 1, %s15
      %p118 = scmp.lt.s32.totalorder %s15, 3
      %p119 = pnand %p117, %p118
      %p120 = pneg %p119
      // Predicated region
      $region9: #{tpu_custom_call.1} parent=5 // pred_check
        _
      $region10: #{tpu_custom_call.1} parent=5 // pred_check_branch
        %122 = sbr.rel (%p119) target = $region12
      $region11: #{tpu_custom_call.1} parent=5 // pred_region
        %s123 = ssub.s32 %s15, 1
        // Predicated region
        $region13: #{tpu_custom_call.1} parent=11 // pred_check
          %p124 = pneg %p62
        $region14: #{tpu_custom_call.1} parent=11 // pred_check_branch
          %126 = sbr.rel (%p124) target = $region16
        $region15: #{tpu_custom_call.1} parent=11 // pred_region
          _
        $region16: #{tpu_custom_call.1} parent=11 // pred_fallthru
          _
        // Predicated region
        $region17: #{tpu_custom_call.1} parent=11 // pred_check
          %p127 = pneg %p83
        $region18: #{tpu_custom_call.1} parent=11 // pred_check_branch
          %129 = sbr.rel (%p127) target = $region20
        $region19: #{tpu_custom_call.1} parent=11 // pred_region
          _
        $region20: #{tpu_custom_call.1} parent=11 // pred_fallthru
          _
      $region12: #{tpu_custom_call.1} parent=5 // pred_fallthru
        _
      %p130 = scmp.lt.s32.totalorder %s15, 2
      // Predicated region
      $region21: #{tpu_custom_call.1} parent=5 // pred_check
        %p131 = pneg %p130
      $region22: #{tpu_custom_call.1} parent=5 // pred_check_branch
        %133 = sbr.rel (%p131) target = $region24
      $region23: #{tpu_custom_call.1} parent=5 // pred_region
        // Predicated region
        $region25: #{tpu_custom_call.1} parent=23 // pred_check
          %p134 = pneg %p35
        $region26: #{tpu_custom_call.1} parent=23 // pred_check_branch
          %136 = sbr.rel (%p134) target = $region28
        $region27: #{tpu_custom_call.1} parent=23 // pred_region
          %s137 = sand.u32 %s25, 1
          %s138 = scalar_lea.sflag [#allocation4], %s137
          %s139 = sand.u32 %s25, 1
          %s140 = smul.addr %s139, 16
          %s141 = scalar_lea.vmem [#allocation3], %s140
          %143 = vsyncadd %s138, 0
          %s144 = smul.addr %s15, 4
          %s145 = smul.addr %s144, 4
          %s146 = scalar_lea.hbm %s0, %s145
          %s148 = sshll.u32 %s146, 4
          %s149 = int_to_ptr.hbm [resolvable:$true] %s148
          %s150 = sshll.u32 %s141, 4
          %s151 = int_to_ptr.vmem [resolvable:$true] %s150
          %153 = dma.hbm_to_vmem [thread:$0]  %s149, 256, %s151, %s138
        $region28: #{tpu_custom_call.1} parent=23 // pred_fallthru
          _
      $region24: #{tpu_custom_call.1} parent=5 // pred_fallthru
        _
      %p154 = scmp.le.s32.totalorder 1, %s15
      %p155 = scmp.lt.s32.totalorder %s15, 3
      %p156 = pnand %p154, %p155
      %p157 = pneg %p156
      // Predicated region
      $region29: #{tpu_custom_call.1} parent=5 // pred_check
        _
      $region30: #{tpu_custom_call.1} parent=5 // pred_check_branch
        %159 = sbr.rel (%p156) target = $region32
      $region31: #{tpu_custom_call.1} parent=5 // pred_region
        %s160 = ssub.s32 %s15, 1
        %s161 = sand.u32 %s28, 1
        %s162 = scalar_lea.sflag [#allocation4], %s161
        %s163 = sand.u32 %s28, 1
        %s164 = smul.addr %s163, 16
        %s165 = scalar_lea.vmem [#allocation3], %s164
        // Predicated region
        $region33: #{tpu_custom_call.1} parent=31 // pred_check
          %p166 = pneg %p41
        $region34: #{tpu_custom_call.1} parent=31 // pred_check_branch
          %168 = sbr.rel (%p166) target = $region36
        $region35: #{tpu_custom_call.1} parent=31 // pred_region
          %170 = dma.done %s162, 256
        $region36: #{tpu_custom_call.1} parent=31 // pred_fallthru
          _
        %s171 = sand.u32 %s28, 1
        %s172 = scalar_lea.sflag [#allocation4], %s171
        %s173 = sand.u32 %s28, 1
        %s174 = smul.addr %s173, 16
        %s175 = scalar_lea.vmem [#allocation3], %s174
        %p176 = pneg %p41
        %p177 = pneg %p38
        %p178 = pneg %p62
        %p179 = pneg %p59
        %p180 = pneg %p83
        %p181 = pneg %p80
        %p182 = pneg %p109
        %p183 = pneg %p106
        %s184 = sand.u32 %s96, 1
        %s185 = scalar_lea.sflag [#allocation5], %s184
        %s186 = sand.u32 %s96, 1
        %s187 = smul.addr %s186, 24
        %s188 = scalar_lea.vmem [#allocation6], %s187
        %189 = vst [vmem:[#allocation2 + $0x60] sm:$0xf0] 0.0
        %190 = vst [vmem:[#allocation2 + $0x68] sm:$0xf0] 0.0
        %191 = vst [vmem:[#allocation2 + $0x70] sm:$0xf0] 0.0
        %v192 = vld [vmem:[%s1] sm:$0xff]
        %v193 = vld [vmem:[%s2] sm:$0xff]
        %v194 = vld [vmem:[%s165] sm:$0xff]
        %v195 = vld [vmem:[%s165 + $0x8] sm:$0xff]
        %198 = vst [vmem:[#allocation1] ss:$2 sm:$0xff] %v194
        %s199 = scalar_lea.vmem [#allocation1], 16
        %200 = vst [vmem:[%s199] ss:$2 sm:$0xff] %v195
        %v201 = vld.sshfl [vmem:[#allocation1] sm:$0xff pattern:$0x75316420]
        %v202 = vld.sshfl [vmem:[#allocation1 + $0x8] sm:$0xff pattern:$0x75316420]
        %v203 = vld.sshfl [vmem:[#allocation1 + $0x10] sm:$0xff pattern:$0x75316420]
        %v204 = vld.sshfl [vmem:[#allocation1 + $0x18] sm:$0xff pattern:$0x75316420]
        %205 = vrot.lane.b32.xlu0 %v201, 105
        %v206 = vpop.permute.xlu0 %205
        %207 = vrot.lane.b32.xlu0 %v202, 105
        %v208 = vpop.permute.xlu0 %207
        %209 = vrot.lane.b32.xlu0 %v203, 105
        %v210 = vpop.permute.xlu0 %209
        %211 = vrot.lane.b32.xlu0 %v204, 105
        %v212 = vpop.permute.xlu0 %211
        %vm213 = vcmask 859136
        %v214 = vsel %vm213, %v206, %v208
        %v215 = vsel %vm213, %v208, %v210
        %v216 = vsel %vm213, %v210, %v212
        %220 = vst [vmem:[#allocation2] sm:$0xf] %v214
        %221 = vst [vmem:[#allocation2 + $0x8] sm:$0xf] %v215
        %222 = vst [vmem:[#allocation2 + $0x10] sm:$0xf] %v216
        %v223 = vld [vmem:[%s165] sm:$0xff]
        %v224 = vld [vmem:[%s165 + $0x8] sm:$0xff]
        %s227 = scalar_lea.vmem [#allocation1], 1
        %228 = vst [vmem:[%s227] ss:$2 sm:$0xff] %v223
        %s229 = scalar_lea.vmem [#allocation1], 17
        %230 = vst [vmem:[%s229] ss:$2 sm:$0xff] %v224
        %v231 = vld.sshfl [vmem:[#allocation1] sm:$0xff pattern:$0x75316420]
        %v232 = vld.sshfl [vmem:[#allocation1 + $0x8] sm:$0xff pattern:$0x75316420]
        %v233 = vld.sshfl [vmem:[#allocation1 + $0x10] sm:$0xff pattern:$0x75316420]
        %v234 = vld.sshfl [vmem:[#allocation1 + $0x18] sm:$0xff pattern:$0x75316420]
        %235 = vrot.lane.b32.xlu0 %v231, 104
        %v236 = vpop.permute.xlu0 %235
        %237 = vrot.lane.b32.xlu0 %v232, 104
        %v238 = vpop.permute.xlu0 %237
        %239 = vrot.lane.b32.xlu0 %v233, 104
        %v240 = vpop.permute.xlu0 %239
        %241 = vrot.lane.b32.xlu0 %v234, 104
        %v242 = vpop.permute.xlu0 %241
        %vm243 = vcmask 850944
        %v244 = vsel %vm243, %v236, %v238
        %v245 = vsel %vm243, %v238, %v240
        %v246 = vsel %vm243, %v240, %v242
        %250 = vst [vmem:[#allocation2] sm:$0xf0] %v244
        %251 = vst [vmem:[#allocation2 + $0x8] sm:$0xf0] %v245
        %252 = vst [vmem:[#allocation2 + $0x10] sm:$0xf0] %v246
        %v253 = vld [vmem:[%s165] sm:$0xff]
        %v254 = vld [vmem:[%s165 + $0x8] sm:$0xff]
        %257 = vst [vmem:[#allocation1] ss:$2 sm:$0xff] %v253
        %s258 = scalar_lea.vmem [#allocation1], 16
        %259 = vst [vmem:[%s258] ss:$2 sm:$0xff] %v254
        %v260 = vld.sshfl [vmem:[#allocation1] sm:$0xff pattern:$0x75316420]
        %v261 = vld.sshfl [vmem:[#allocation1 + $0x8] sm:$0xff pattern:$0x75316420]
        %v262 = vld.sshfl [vmem:[#allocation1 + $0x10] sm:$0xff pattern:$0x75316420]
        %v263 = vld.sshfl [vmem:[#allocation1 + $0x18] sm:$0xff pattern:$0x75316420]
        %264 = vrot.lane.b32.xlu0 %v260, 103
        %v265 = vpop.permute.xlu0 %264
        %266 = vrot.lane.b32.xlu0 %v261, 103
        %v267 = vpop.permute.xlu0 %266
        %268 = vrot.lane.b32.xlu0 %v262, 103
        %v269 = vpop.permute.xlu0 %268
        %270 = vrot.lane.b32.xlu0 %v263, 103
        %v271 = vpop.permute.xlu0 %270
        %vm272 = vcmask 842752
        %v273 = vsel %vm272, %v265, %v267
        %v274 = vsel %vm272, %v267, %v269
        %v275 = vsel %vm272, %v269, %v271
        %279 = vst [vmem:[#allocation2 + $0x18] sm:$0xf] %v273
        %280 = vst [vmem:[#allocation2 + $0x20] sm:$0xf] %v274
        %281 = vst [vmem:[#allocation2 + $0x28] sm:$0xf] %v275
        %v282 = vld [vmem:[%s165] sm:$0xff]
        %v283 = vld [vmem:[%s165 + $0x8] sm:$0xff]
        %s286 = scalar_lea.vmem [#allocation1], 1
        %287 = vst [vmem:[%s286] ss:$2 sm:$0xff] %v282
        %s288 = scalar_lea.vmem [#allocation1], 17
        %289 = vst [vmem:[%s288] ss:$2 sm:$0xff] %v283
        %v290 = vld.sshfl [vmem:[#allocation1] sm:$0xff pattern:$0x75316420]
        %v291 = vld.sshfl [vmem:[#allocation1 + $0x8] sm:$0xff pattern:$0x75316420]
        %v292 = vld.sshfl [vmem:[#allocation1 + $0x10] sm:$0xff pattern:$0x75316420]
        %v293 = vld.sshfl [vmem:[#allocation1 + $0x18] sm:$0xff pattern:$0x75316420]
        %294 = vrot.lane.b32.xlu0 %v290, 81
        %v295 = vpop.permute.xlu0 %294
        %296 = vrot.lane.b32.xlu0 %v291, 81
        %v297 = vpop.permute.xlu0 %296
        %298 = vrot.lane.b32.xlu0 %v292, 81
        %v299 = vpop.permute.xlu0 %298
        %300 = vrot.lane.b32.xlu0 %v293, 81
        %v301 = vpop.permute.xlu0 %300
        %vm302 = vcmask 662528
        %v303 = vsel %vm302, %v295, %v297
        %v304 = vsel %vm302, %v297, %v299
        %v305 = vsel %vm302, %v299, %v301
        %309 = vst [vmem:[#allocation2 + $0x18] sm:$0xf0] %v303
        %310 = vst [vmem:[#allocation2 + $0x20] sm:$0xf0] %v304
        %311 = vst [vmem:[#allocation2 + $0x28] sm:$0xf0] %v305
        %v312 = vld [vmem:[%s165] sm:$0xff]
        %v313 = vld [vmem:[%s165 + $0x8] sm:$0xff]
        %316 = vst [vmem:[#allocation1] ss:$2 sm:$0xff] %v312
        %s317 = scalar_lea.vmem [#allocation1], 16
        %318 = vst [vmem:[%s317] ss:$2 sm:$0xff] %v313
        %v319 = vld.sshfl [vmem:[#allocation1] sm:$0xff pattern:$0x75316420]
        %v320 = vld.sshfl [vmem:[#allocation1 + $0x8] sm:$0xff pattern:$0x75316420]
        %v321 = vld.sshfl [vmem:[#allocation1 + $0x10] sm:$0xff pattern:$0x75316420]
        %v322 = vld.sshfl [vmem:[#allocation1 + $0x18] sm:$0xff pattern:$0x75316420]
        %323 = vrot.lane.b32.xlu0 %v319, 80
        %v324 = vpop.permute.xlu0 %323
        %325 = vrot.lane.b32.xlu0 %v320, 80
        %v326 = vpop.permute.xlu0 %325
        %327 = vrot.lane.b32.xlu0 %v321, 80
        %v328 = vpop.permute.xlu0 %327
        %329 = vrot.lane.b32.xlu0 %v322, 80
        %v330 = vpop.permute.xlu0 %329
        %vm331 = vcmask 654336
        %v332 = vsel %vm331, %v324, %v326
        %v333 = vsel %vm331, %v326, %v328
        %v334 = vsel %vm331, %v328, %v330
        %338 = vst [vmem:[#allocation2 + $0x30] sm:$0xf] %v332
        %339 = vst [vmem:[#allocation2 + $0x38] sm:$0xf] %v333
        %340 = vst [vmem:[#allocation2 + $0x40] sm:$0xf] %v334
        %v341 = vld [vmem:[%s165] sm:$0xff]
        %v342 = vld [vmem:[%s165 + $0x8] sm:$0xff]
        %s345 = scalar_lea.vmem [#allocation1], 1
        %346 = vst [vmem:[%s345] ss:$2 sm:$0xff] %v341
        %s347 = scalar_lea.vmem [#allocation1], 17
        %348 = vst [vmem:[%s347] ss:$2 sm:$0xff] %v342
        %v349 = vld.sshfl [vmem:[#allocation1] sm:$0xff pattern:$0x75316420]
        %v350 = vld.sshfl [vmem:[#allocation1 + $0x8] sm:$0xff pattern:$0x75316420]
        %v351 = vld.sshfl [vmem:[#allocation1 + $0x10] sm:$0xff pattern:$0x75316420]
        %v352 = vld.sshfl [vmem:[#allocation1 + $0x18] sm:$0xff pattern:$0x75316420]
        %353 = vrot.lane.b32.xlu0 %v349, 79
        %v354 = vpop.permute.xlu0 %353
        %355 = vrot.lane.b32.xlu0 %v350, 79
        %v356 = vpop.permute.xlu0 %355
        %357 = vrot.lane.b32.xlu0 %v351, 79
        %v358 = vpop.permute.xlu0 %357
        %359 = vrot.lane.b32.xlu0 %v352, 79
        %v360 = vpop.permute.xlu0 %359
        %vm361 = vcmask 646144
        %v362 = vsel %vm361, %v354, %v356
        %v363 = vsel %vm361, %v356, %v358
        %v364 = vsel %vm361, %v358, %v360
        %368 = vst [vmem:[#allocation2 + $0x30] sm:$0xf0] %v362
        %369 = vst [vmem:[#allocation2 + $0x38] sm:$0xf0] %v363
        %370 = vst [vmem:[#allocation2 + $0x40] sm:$0xf0] %v364
        %v371 = vld [vmem:[%s165] sm:$0xff]
        %v372 = vld [vmem:[%s165 + $0x8] sm:$0xff]
        %375 = vst [vmem:[#allocation1] ss:$2 sm:$0xff] %v371
        %s376 = scalar_lea.vmem [#allocation1], 16
        %377 = vst [vmem:[%s376] ss:$2 sm:$0xff] %v372
        %v378 = vld.sshfl [vmem:[#allocation1] sm:$0xff pattern:$0x75316420]
        %v379 = vld.sshfl [vmem:[#allocation1 + $0x8] sm:$0xff pattern:$0x75316420]
        %v380 = vld.sshfl [vmem:[#allocation1 + $0x10] sm:$0xff pattern:$0x75316420]
        %v381 = vld.sshfl [vmem:[#allocation1 + $0x18] sm:$0xff pattern:$0x75316420]
        %382 = vrot.lane.b32.xlu0 %v378, 57
        %v383 = vpop.permute.xlu0 %382
        %384 = vrot.lane.b32.xlu0 %v379, 57
        %v385 = vpop.permute.xlu0 %384
        %386 = vrot.lane.b32.xlu0 %v380, 57
        %v387 = vpop.permute.xlu0 %386
        %388 = vrot.lane.b32.xlu0 %v381, 57
        %v389 = vpop.permute.xlu0 %388
        %vm390 = vcmask 465920
        %v391 = vsel %vm390, %v383, %v385
        %v392 = vsel %vm390, %v385, %v387
        %v393 = vsel %vm390, %v387, %v389
        %397 = vst [vmem:[#allocation2 + $0x48] sm:$0xf] %v391
        %398 = vst [vmem:[#allocation2 + $0x50] sm:$0xf] %v392
        %399 = vst [vmem:[#allocation2 + $0x58] sm:$0xf] %v393
        %v400 = vld [vmem:[%s165] sm:$0xff]
        %v401 = vld [vmem:[%s165 + $0x8] sm:$0xff]
        %s404 = scalar_lea.vmem [#allocation1], 1
        %405 = vst [vmem:[%s404] ss:$2 sm:$0xff] %v400
        %s406 = scalar_lea.vmem [#allocation1], 17
        %407 = vst [vmem:[%s406] ss:$2 sm:$0xff] %v401
        %v408 = vld.sshfl [vmem:[#allocation1] sm:$0xff pattern:$0x75316420]
        %v409 = vld.sshfl [vmem:[#allocation1 + $0x8] sm:$0xff pattern:$0x75316420]
        %v410 = vld.sshfl [vmem:[#allocation1 + $0x10] sm:$0xff pattern:$0x75316420]
        %v411 = vld.sshfl [vmem:[#allocation1 + $0x18] sm:$0xff pattern:$0x75316420]
        %412 = vrot.lane.b32.xlu0 %v408, 56
        %v413 = vpop.permute.xlu0 %412
        %414 = vrot.lane.b32.xlu0 %v409, 56
        %v415 = vpop.permute.xlu0 %414
        %416 = vrot.lane.b32.xlu0 %v410, 56
        %v417 = vpop.permute.xlu0 %416
        %418 = vrot.lane.b32.xlu0 %v411, 56
        %v419 = vpop.permute.xlu0 %418
        %vm420 = vcmask 457728
        %v421 = vsel %vm420, %v413, %v415
        %v422 = vsel %vm420, %v415, %v417
        %v423 = vsel %vm420, %v417, %v419
        %427 = vst [vmem:[#allocation2 + $0x48] sm:$0xf0] %v421
        %428 = vst [vmem:[#allocation2 + $0x50] sm:$0xf0] %v422
        %429 = vst [vmem:[#allocation2 + $0x58] sm:$0xf0] %v423
        %v430 = vld [vmem:[%s165] sm:$0xff]
        %v431 = vld [vmem:[%s165 + $0x8] sm:$0xff]
        %434 = vst [vmem:[#allocation1] ss:$2 sm:$0xff] %v430
        %s435 = scalar_lea.vmem [#allocation1], 16
        %436 = vst [vmem:[%s435] ss:$2 sm:$0xff] %v431
        %v437 = vld.sshfl [vmem:[#allocation1] sm:$0xff pattern:$0x75316420]
        %v438 = vld.sshfl [vmem:[#allocation1 + $0x8] sm:$0xff pattern:$0x75316420]
        %v439 = vld.sshfl [vmem:[#allocation1 + $0x10] sm:$0xff pattern:$0x75316420]
        %v440 = vld.sshfl [vmem:[#allocation1 + $0x18] sm:$0xff pattern:$0x75316420]
        %441 = vrot.lane.b32.xlu0 %v437, 55
        %v442 = vpop.permute.xlu0 %441
        %443 = vrot.lane.b32.xlu0 %v438, 55
        %v444 = vpop.permute.xlu0 %443
        %445 = vrot.lane.b32.xlu0 %v439, 55
        %v446 = vpop.permute.xlu0 %445
        %447 = vrot.lane.b32.xlu0 %v440, 55
        %v448 = vpop.permute.xlu0 %447
        %vm449 = vcmask 449536
        %v450 = vsel %vm449, %v442, %v444
        %v451 = vsel %vm449, %v444, %v446
        %v452 = vsel %vm449, %v446, %v448
        %456 = vst [vmem:[#allocation2 + $0x60] sm:$0xf] %v450
        %457 = vst [vmem:[#allocation2 + $0x68] sm:$0xf] %v451
        %458 = vst [vmem:[#allocation2 + $0x70] sm:$0xf] %v452
        %v459 = vld [vmem:[#allocation2] sm:$0xff]
        %v460 = vld [vmem:[#allocation2 + $0x8] sm:$0xff]
        %v461 = vld [vmem:[#allocation2 + $0x10] sm:$0xff]
        %v462 = vld [vmem:[#allocation2 + $0x18] sm:$0xff]
        %v463 = vld [vmem:[#allocation2 + $0x20] sm:$0xff]
        %v464 = vld [vmem:[#allocation2 + $0x28] sm:$0xff]
        %v465 = vld [vmem:[#allocation2 + $0x30] sm:$0xff]
        %v466 = vld [vmem:[#allocation2 + $0x38] sm:$0xff]
        %v467 = vld [vmem:[#allocation2 + $0x40] sm:$0xff]
        %v468 = vld [vmem:[#allocation2 + $0x48] sm:$0xff]
        %v469 = vld [vmem:[#allocation2 + $0x50] sm:$0xff]
        %v470 = vld [vmem:[#allocation2 + $0x58] sm:$0xff]
        %v471 = vld [vmem:[#allocation2 + $0x60] sm:$0xff]
        %v472 = vld [vmem:[#allocation2 + $0x68] sm:$0xff]
        %v473 = vld [vmem:[#allocation2 + $0x70] sm:$0xff]
        %475 = vset.pattern.permute.xlu0 0
        %476 = vperm.xlu0 %475, %v193
        %v477 = vpop.permute.xlu0 %476
        %vm479 = vcmask 326656
        %v481 = vsel %vm479, %v192, 0
        %483 = vmatpush.msra.mxu0 0.0
        %484 = vmatpush.msra.mxu0 0.0
        %485 = vmatpush.msra.mxu0 0.0
        %486 = vmatpush.msra.mxu0 0.0
        %487 = vmatpush.msra.mxu0 0.0
        %488 = vmatpush.msra.mxu0 0.0
        %489 = vmatpush.msra.mxu0 0.0
        %490 = vmatpush.msra.mxu0 0.0
        %491 = vmatpush.msra.mxu0 0.0
        %492 = vmatpush.msra.mxu0 0.0
        %493 = vmatpush.msra.mxu0 0.0
        %494 = vmatpush.msra.mxu0 %v471
        %495 = vmatpush.msra.mxu0 %v468
        %496 = vmatpush.msra.mxu0 %v465
        %497 = vmatpush.msra.mxu0 %v462
        %498 = vmatpush.msra.mxu0 %v459
        %499 = vmatmul.f32.gmra.mxu0 %v481
        %v500 = vpop.f32.mrf.mxu0
        %v501 = vadd.f32 %v477, %v500
        %502 = vdwg.mxu0
        %503 = vmatpush.msra.mxu0 0.0
        %504 = vmatpush.msra.mxu0 0.0
        %505 = vmatpush.msra.mxu0 0.0
        %506 = vmatpush.msra.mxu0 0.0
        %507 = vmatpush.msra.mxu0 0.0
        %508 = vmatpush.msra.mxu0 0.0
        %509 = vmatpush.msra.mxu0 0.0
        %510 = vmatpush.msra.mxu0 0.0
        %511 = vmatpush.msra.mxu0 0.0
        %512 = vmatpush.msra.mxu0 0.0
        %513 = vmatpush.msra.mxu0 0.0
        %514 = vmatpush.msra.mxu0 %v472
        %515 = vmatpush.msra.mxu0 %v469
        %516 = vmatpush.msra.mxu0 %v466
        %517 = vmatpush.msra.mxu0 %v463
        %518 = vmatpush.msra.mxu0 %v460
        %519 = vmatmul.f32.gmra.mxu0 %v481
        %v520 = vpop.f32.mrf.mxu0
        %v521 = vadd.f32 %v477, %v520
        %522 = vdwg.mxu0
        %523 = vmatpush.msra.mxu0 0.0
        %524 = vmatpush.msra.mxu0 0.0
        %525 = vmatpush.msra.mxu0 0.0
        %526 = vmatpush.msra.mxu0 0.0
        %527 = vmatpush.msra.mxu0 0.0
        %528 = vmatpush.msra.mxu0 0.0
        %529 = vmatpush.msra.mxu0 0.0
        %530 = vmatpush.msra.mxu0 0.0
        %531 = vmatpush.msra.mxu0 0.0
        %532 = vmatpush.msra.mxu0 0.0
        %533 = vmatpush.msra.mxu0 0.0
        %534 = vmatpush.msra.mxu0 %v473
        %535 = vmatpush.msra.mxu0 %v470
        %536 = vmatpush.msra.mxu0 %v467
        %537 = vmatpush.msra.mxu0 %v464
        %538 = vmatpush.msra.mxu0 %v461
        %539 = vmatmul.f32.gmra.mxu0 %v481
        %v540 = vpop.f32.mrf.mxu0
        %v541 = vadd.f32 %v477, %v540
        %542 = vdwg.mxu0
        %543 = vst [vmem:[%s188] sm:$0xff] %v501
        %544 = vst [vmem:[%s188 + $0x8] sm:$0xff] %v521
        %545 = vst [vmem:[%s188 + $0x10] sm:$0xff] %v541
        %s546 = sand.u32 %s96, 1
        %s547 = scalar_lea.sflag [#allocation5], %s546
        %s548 = sand.u32 %s96, 1
        %s549 = smul.addr %s548, 24
        %s550 = scalar_lea.vmem [#allocation6], %s549
        // Predicated region
        $region37: #{tpu_custom_call.1} parent=31 // pred_check
          %p551 = pneg %p106
        $region38: #{tpu_custom_call.1} parent=31 // pred_check_branch
          %553 = sbr.rel (%p551) target = $region40
        $region39: #{tpu_custom_call.1} parent=31 // pred_region
          %555 = vsyncadd %s547, 0
          %s556 = smul.addr %s20, 3
          %s557 = smul.addr %s556, 8
          %s558 = scalar_lea.hbm %s3, %s557
          %s560 = sshll.u32 %s550, 4
          %s561 = int_to_ptr.vmem [resolvable:$true] %s560
          %s562 = sshll.u32 %s558, 4
          %s563 = int_to_ptr.hbm [resolvable:$true] %s562
          %565 = dma.vmem_to_hbm [thread:$0]  %s561, 384, %s563, %s547
        $region40: #{tpu_custom_call.1} parent=31 // pred_fallthru
          _
      $region32: #{tpu_custom_call.1} parent=5 // pred_fallthru
        _
      %p566 = scmp.le.s32.totalorder 2, %s15
      // Predicated region
      $region41: #{tpu_custom_call.1} parent=5 // pred_check
        %p567 = pneg %p566
      $region42: #{tpu_custom_call.1} parent=5 // pred_check_branch
        %569 = sbr.rel (%p567) target = $region44
      $region43: #{tpu_custom_call.1} parent=5 // pred_region
        %s570 = ssub.s32 %s15, 2
        // Predicated region
        $region45: #{tpu_custom_call.1} parent=43 // pred_check
          %p571 = pneg %p112
        $region46: #{tpu_custom_call.1} parent=43 // pred_check_branch
          %573 = sbr.rel (%p571) target = $region48
        $region47: #{tpu_custom_call.1} parent=43 // pred_region
          %s574 = sand.u32 %s97, 1
          %s575 = scalar_lea.sflag [#allocation5], %s574
          %s576 = sand.u32 %s97, 1
          %s577 = smul.addr %s576, 24
          %s578 = scalar_lea.vmem [#allocation6], %s577
          %580 = dma.done %s575, 384
        $region48: #{tpu_custom_call.1} parent=43 // pred_fallthru
          _
      $region44: #{tpu_custom_call.1} parent=5 // pred_fallthru
        _
    $region6: #{tpu_custom_call.1} parent=1 // loop_footer
      %s19 = sadd.s32 1, %s15
    $region7: #{tpu_custom_call.1} parent=1 // loop_footer_branch
      %14 = sbr.rel target = $region3
    $region8: #{tpu_custom_call.1} parent=1 // loop_exit
      _
    %581 = vsyncpa [#allocation4], 1
    %s582 = scalar_lea.sflag [#allocation4], 1
    %583 = vsyncpa %s582, 1
    %584 = vsyncpa [#allocation5], 1
    %s585 = scalar_lea.sflag [#allocation5], 1
    %586 = vsyncpa %s585, 1

</llo_original>
